<compile_context>
chip_gen: v7x
topology: tpu7x:2x2x1
jax: 0.10.0
libtpu: 0.0.40
codegen_flags: <defaults>
</compile_context>

<pallas_src>
import functools

import jax
import jax.numpy as jnp
from jax.experimental import pallas as pl
from jax.experimental.pallas import tpu as pltpu

STATE_DIM = 2
HIDDEN = 10
ACTION_DIM = 1

LANE = 128                     # batch rows per lane-row
DEFAULT_MAX_TILE_ROWS = 2048   # 2048 * 128 = 262144 batch rows per grid step
_MIN_SPLIT_ROWS = 8            # split into >=2 grid steps only when rows >= 2*this


def _round_up(n, m):
    return ((n + m - 1) // m) * m


def _mlp_kernel(w1_ref, w2_ref, x_ref, o_ref):
    # w1_ref: SMEM (HIDDEN*STATE_DIM,), flattened row-major from (HIDDEN, STATE_DIM)
    # w2_ref: SMEM (HIDDEN,)
    # x_ref : VMEM (STATE_DIM, tile_rows, 128)   -- batch on sublanes x lanes
    # o_ref : VMEM (tile_rows, 128)
    x0 = x_ref[0]
    x1 = x_ref[1]
    acc = None
    for j in range(HIDDEN):  # statically unrolled: 10 scalar*vreg MACs on the VPU
        h = jnp.maximum(
            w1_ref[STATE_DIM * j] * x0 + w1_ref[STATE_DIM * j + 1] * x1, 0.0
        )
        t = w2_ref[j] * h
        acc = t if acc is None else acc + t
    o_ref[...] = acc


@functools.partial(jax.jit, static_argnames=("max_tile_rows",))
def net1_forward(x, w1, w2, *, max_tile_rows=DEFAULT_MAX_TILE_ROWS):
    """x: (B, STATE_DIM). w1: (HIDDEN, STATE_DIM). w2: (ACTION_DIM, HIDDEN).

    Returns (B, ACTION_DIM), matching PyTorch Net1.forward semantics.
    """
    B = x.shape[0]
    x = x.astype(jnp.float32)
    w1_flat = jnp.asarray(w1, jnp.float32).reshape(HIDDEN * STATE_DIM)
    w2_flat = jnp.asarray(w2, jnp.float32).reshape(HIDDEN)

    rows = pl.cdiv(B, LANE)
    if rows >= 2 * _MIN_SPLIT_ROWS:
        # Large batch: balanced full tiles; force >=2 grid steps so both v7x
        # TensorCores get work (parallel annotation is a no-op on v5e/v6e).
        grid_steps = max(2, pl.cdiv(rows, max_tile_rows))
        tile_rows = _round_up(pl.cdiv(rows, grid_steps), 8)
        grid_steps = pl.cdiv(rows, tile_rows)
    else:
        # Small-batch fast path: one block, one grid step, no pipelining overhead.
        tile_rows = rows
        grid_steps = 1
    rows_pad = grid_steps * tile_rows
    b_pad = rows_pad * LANE

    # One-time lane-dense relayout (one XLA pass; pad fuses with the transpose).
    # Zero-padded rows are exact for bias-free linear + ReLU and are sliced off.
    xt = x.T                                   # (STATE_DIM, B)
    if b_pad != B:
        xt = jnp.pad(xt, ((0, 0), (0, b_pad - B)))
    x3 = xt.reshape(STATE_DIM, rows_pad, LANE)  # free reshape

    cost = pl.CostEstimate(
        flops=2 * b_pad * (STATE_DIM * HIDDEN + HIDDEN * ACTION_DIM),
        transcendentals=0,
        bytes_accessed=4 * (b_pad * STATE_DIM + b_pad * ACTION_DIM
                            + HIDDEN * STATE_DIM + HIDDEN),
    )

    out = pl.pallas_call(
        _mlp_kernel,
        out_shape=jax.ShapeDtypeStruct((rows_pad, LANE), jnp.float32),
        grid=(grid_steps,),
        in_specs=[
            pl.BlockSpec(memory_space=pltpu.MemorySpace.SMEM),  # w1: 20 scalars
            pl.BlockSpec(memory_space=pltpu.MemorySpace.SMEM),  # w2: 10 scalars
            pl.BlockSpec((STATE_DIM, tile_rows, LANE), lambda i: (0, i, 0)),
        ],
        out_specs=pl.BlockSpec((tile_rows, LANE), lambda i: (i, 0)),
        compiler_params=pltpu.CompilerParams(
            dimension_semantics=("parallel",),
            vmem_limit_bytes=32 * 1024 * 1024,
        ),
        cost_estimate=cost,
    )(w1_flat, w2_flat, x3)

    # (rows_pad, 128) -> (b_pad, 1) is a free reshape (identical memory layout).
    return out.reshape(b_pad, ACTION_DIM)[:B]


if __name__ == "__main__":
    key = jax.random.PRNGKey(0)
    k1, k2, kx, ky = jax.random.split(key, 4)

    # PyTorch Linear weight shapes are (out_features, in_features); .normal_(0, 0.5).
    w1 = 0.5 * jax.random.normal(k1, (HIDDEN, STATE_DIM), jnp.float32)
    w2 = 0.5 * jax.random.normal(k2, (ACTION_DIM, HIDDEN), jnp.float32)

    def ref_fn(xv):
        return jnp.maximum(xv @ w1.T, 0.0) @ w2.T

    # Small-batch fast path (single block; mirrors snake.py's ~40 states).
    x_small = jax.random.normal(kx, (40, STATE_DIM), jnp.float32)
    out_small = net1_forward(x_small, w1, w2)
    jax.block_until_ready(out_small)
    assert out_small.shape == (40, ACTION_DIM)
    assert jnp.allclose(out_small, ref_fn(x_small), atol=1e-5, rtol=1e-5)

    # Multi-step path: small max_tile_rows forces several parallel grid steps
    # plus ragged-batch padding.
    x_big = jax.random.normal(ky, (5000, STATE_DIM), jnp.float32)
    out_big = net1_forward(x_big, w1, w2, max_tile_rows=8)
    jax.block_until_ready(out_big)
    assert out_big.shape == (5000, ACTION_DIM)
    assert jnp.allclose(out_big, ref_fn(x_big), atol=1e-5, rtol=1e-5)

    print("KERNEL_OK")
</pallas_src>

<mosaic_0001>
module attributes {stable_mosaic.version = 11 : i64} {
  func.func @_mlp_kernel(%arg0: i32, %arg1: memref<20xf32, #tpu.memory_space<smem>>, %arg2: memref<10xf32, #tpu.memory_space<smem>>, %arg3: memref<2x1x128xf32, #tpu.memory_space<vmem>>, %arg4: memref<1x128xf32, #tpu.memory_space<vmem>>) attributes {dimension_semantics = [#tpu.dimension_semantics<parallel>], iteration_bounds = array<i64: 1>, scalar_prefetch = 0 : i64, scratch_operands = 0 : i64, tpu.core_type = #tpu.core_type<tc>, window_params = [{transform_indices = @transform_0, window_bounds = array<i64: 20>}, {transform_indices = @transform_1, window_bounds = array<i64: 10>}, {transform_indices = @transform_2, window_bounds = array<i64: 2, 1, 128>}, {transform_indices = @transform_3, window_bounds = array<i64: 1, 128>}]} {
    %c0 = arith.constant 0 : index
    %c0_0 = arith.constant 0 : index
    %c0_1 = arith.constant 0 : index
    %0 = vector.load %arg3[%c0, %c0_0, %c0_1] : memref<2x1x128xf32, #tpu.memory_space<vmem>>, vector<1x1x128xf32>
    %1 = vector.shape_cast %0 : vector<1x1x128xf32> to vector<1x128xf32>
    %c1 = arith.constant 1 : index
    %c0_2 = arith.constant 0 : index
    %c0_3 = arith.constant 0 : index
    %2 = vector.load %arg3[%c1, %c0_2, %c0_3] : memref<2x1x128xf32, #tpu.memory_space<vmem>>, vector<1x1x128xf32>
    %3 = vector.shape_cast %2 : vector<1x1x128xf32> to vector<1x128xf32>
    %c0_4 = arith.constant 0 : index
    %4 = memref.load %arg1[%c0_4] : memref<20xf32, #tpu.memory_space<smem>>
    %5 = vector.broadcast %4 : f32 to vector<1x128xf32>
    %6 = arith.mulf %5, %1 : vector<1x128xf32>
    %c1_5 = arith.constant 1 : index
    %7 = memref.load %arg1[%c1_5] : memref<20xf32, #tpu.memory_space<smem>>
    %8 = vector.broadcast %7 : f32 to vector<1x128xf32>
    %9 = arith.mulf %8, %3 : vector<1x128xf32>
    %10 = arith.addf %6, %9 : vector<1x128xf32>
    %cst = arith.constant 0.000000e+00 : f32
    %11 = vector.broadcast %cst : f32 to vector<1x128xf32>
    %12 = arith.maximumf %10, %11 : vector<1x128xf32>
    %c0_6 = arith.constant 0 : index
    %13 = memref.load %arg2[%c0_6] : memref<10xf32, #tpu.memory_space<smem>>
    %14 = vector.broadcast %13 : f32 to vector<1x128xf32>
    %15 = arith.mulf %14, %12 : vector<1x128xf32>
    %c2 = arith.constant 2 : index
    %16 = memref.load %arg1[%c2] : memref<20xf32, #tpu.memory_space<smem>>
    %17 = vector.broadcast %16 : f32 to vector<1x128xf32>
    %18 = arith.mulf %17, %1 : vector<1x128xf32>
    %c3 = arith.constant 3 : index
    %19 = memref.load %arg1[%c3] : memref<20xf32, #tpu.memory_space<smem>>
    %20 = vector.broadcast %19 : f32 to vector<1x128xf32>
    %21 = arith.mulf %20, %3 : vector<1x128xf32>
    %22 = arith.addf %18, %21 : vector<1x128xf32>
    %cst_7 = arith.constant 0.000000e+00 : f32
    %23 = vector.broadcast %cst_7 : f32 to vector<1x128xf32>
    %24 = arith.maximumf %22, %23 : vector<1x128xf32>
    %c1_8 = arith.constant 1 : index
    %25 = memref.load %arg2[%c1_8] : memref<10xf32, #tpu.memory_space<smem>>
    %26 = vector.broadcast %25 : f32 to vector<1x128xf32>
    %27 = arith.mulf %26, %24 : vector<1x128xf32>
    %28 = arith.addf %15, %27 : vector<1x128xf32>
    %c4 = arith.constant 4 : index
    %29 = memref.load %arg1[%c4] : memref<20xf32, #tpu.memory_space<smem>>
    %30 = vector.broadcast %29 : f32 to vector<1x128xf32>
    %31 = arith.mulf %30, %1 : vector<1x128xf32>
    %c5 = arith.constant 5 : index
    %32 = memref.load %arg1[%c5] : memref<20xf32, #tpu.memory_space<smem>>
    %33 = vector.broadcast %32 : f32 to vector<1x128xf32>
    %34 = arith.mulf %33, %3 : vector<1x128xf32>
    %35 = arith.addf %31, %34 : vector<1x128xf32>
    %cst_9 = arith.constant 0.000000e+00 : f32
    %36 = vector.broadcast %cst_9 : f32 to vector<1x128xf32>
    %37 = arith.maximumf %35, %36 : vector<1x128xf32>
    %c2_10 = arith.constant 2 : index
    %38 = memref.load %arg2[%c2_10] : memref<10xf32, #tpu.memory_space<smem>>
    %39 = vector.broadcast %38 : f32 to vector<1x128xf32>
    %40 = arith.mulf %39, %37 : vector<1x128xf32>
    %41 = arith.addf %28, %40 : vector<1x128xf32>
    %c6 = arith.constant 6 : index
    %42 = memref.load %arg1[%c6] : memref<20xf32, #tpu.memory_space<smem>>
    %43 = vector.broadcast %42 : f32 to vector<1x128xf32>
    %44 = arith.mulf %43, %1 : vector<1x128xf32>
    %c7 = arith.constant 7 : index
    %45 = memref.load %arg1[%c7] : memref<20xf32, #tpu.memory_space<smem>>
    %46 = vector.broadcast %45 : f32 to vector<1x128xf32>
    %47 = arith.mulf %46, %3 : vector<1x128xf32>
    %48 = arith.addf %44, %47 : vector<1x128xf32>
    %cst_11 = arith.constant 0.000000e+00 : f32
    %49 = vector.broadcast %cst_11 : f32 to vector<1x128xf32>
    %50 = arith.maximumf %48, %49 : vector<1x128xf32>
    %c3_12 = arith.constant 3 : index
    %51 = memref.load %arg2[%c3_12] : memref<10xf32, #tpu.memory_space<smem>>
    %52 = vector.broadcast %51 : f32 to vector<1x128xf32>
    %53 = arith.mulf %52, %50 : vector<1x128xf32>
    %54 = arith.addf %41, %53 : vector<1x128xf32>
    %c8 = arith.constant 8 : index
    %55 = memref.load %arg1[%c8] : memref<20xf32, #tpu.memory_space<smem>>
    %56 = vector.broadcast %55 : f32 to vector<1x128xf32>
    %57 = arith.mulf %56, %1 : vector<1x128xf32>
    %c9 = arith.constant 9 : index
    %58 = memref.load %arg1[%c9] : memref<20xf32, #tpu.memory_space<smem>>
    %59 = vector.broadcast %58 : f32 to vector<1x128xf32>
    %60 = arith.mulf %59, %3 : vector<1x128xf32>
    %61 = arith.addf %57, %60 : vector<1x128xf32>
    %cst_13 = arith.constant 0.000000e+00 : f32
    %62 = vector.broadcast %cst_13 : f32 to vector<1x128xf32>
    %63 = arith.maximumf %61, %62 : vector<1x128xf32>
    %c4_14 = arith.constant 4 : index
    %64 = memref.load %arg2[%c4_14] : memref<10xf32, #tpu.memory_space<smem>>
    %65 = vector.broadcast %64 : f32 to vector<1x128xf32>
    %66 = arith.mulf %65, %63 : vector<1x128xf32>
    %67 = arith.addf %54, %66 : vector<1x128xf32>
    %c10 = arith.constant 10 : index
    %68 = memref.load %arg1[%c10] : memref<20xf32, #tpu.memory_space<smem>>
    %69 = vector.broadcast %68 : f32 to vector<1x128xf32>
    %70 = arith.mulf %69, %1 : vector<1x128xf32>
    %c11 = arith.constant 11 : index
    %71 = memref.load %arg1[%c11] : memref<20xf32, #tpu.memory_space<smem>>
    %72 = vector.broadcast %71 : f32 to vector<1x128xf32>
    %73 = arith.mulf %72, %3 : vector<1x128xf32>
    %74 = arith.addf %70, %73 : vector<1x128xf32>
    %cst_15 = arith.constant 0.000000e+00 : f32
    %75 = vector.broadcast %cst_15 : f32 to vector<1x128xf32>
    %76 = arith.maximumf %74, %75 : vector<1x128xf32>
    %c5_16 = arith.constant 5 : index
    %77 = memref.load %arg2[%c5_16] : memref<10xf32, #tpu.memory_space<smem>>
    %78 = vector.broadcast %77 : f32 to vector<1x128xf32>
    %79 = arith.mulf %78, %76 : vector<1x128xf32>
    %80 = arith.addf %67, %79 : vector<1x128xf32>
    %c12 = arith.constant 12 : index
    %81 = memref.load %arg1[%c12] : memref<20xf32, #tpu.memory_space<smem>>
    %82 = vector.broadcast %81 : f32 to vector<1x128xf32>
    %83 = arith.mulf %82, %1 : vector<1x128xf32>
    %c13 = arith.constant 13 : index
    %84 = memref.load %arg1[%c13] : memref<20xf32, #tpu.memory_space<smem>>
    %85 = vector.broadcast %84 : f32 to vector<1x128xf32>
    %86 = arith.mulf %85, %3 : vector<1x128xf32>
    %87 = arith.addf %83, %86 : vector<1x128xf32>
    %cst_17 = arith.constant 0.000000e+00 : f32
    %88 = vector.broadcast %cst_17 : f32 to vector<1x128xf32>
    %89 = arith.maximumf %87, %88 : vector<1x128xf32>
    %c6_18 = arith.constant 6 : index
    %90 = memref.load %arg2[%c6_18] : memref<10xf32, #tpu.memory_space<smem>>
    %91 = vector.broadcast %90 : f32 to vector<1x128xf32>
    %92 = arith.mulf %91, %89 : vector<1x128xf32>
    %93 = arith.addf %80, %92 : vector<1x128xf32>
    %c14 = arith.constant 14 : index
    %94 = memref.load %arg1[%c14] : memref<20xf32, #tpu.memory_space<smem>>
    %95 = vector.broadcast %94 : f32 to vector<1x128xf32>
    %96 = arith.mulf %95, %1 : vector<1x128xf32>
    %c15 = arith.constant 15 : index
    %97 = memref.load %arg1[%c15] : memref<20xf32, #tpu.memory_space<smem>>
    %98 = vector.broadcast %97 : f32 to vector<1x128xf32>
    %99 = arith.mulf %98, %3 : vector<1x128xf32>
    %100 = arith.addf %96, %99 : vector<1x128xf32>
    %cst_19 = arith.constant 0.000000e+00 : f32
    %101 = vector.broadcast %cst_19 : f32 to vector<1x128xf32>
    %102 = arith.maximumf %100, %101 : vector<1x128xf32>
    %c7_20 = arith.constant 7 : index
    %103 = memref.load %arg2[%c7_20] : memref<10xf32, #tpu.memory_space<smem>>
    %104 = vector.broadcast %103 : f32 to vector<1x128xf32>
    %105 = arith.mulf %104, %102 : vector<1x128xf32>
    %106 = arith.addf %93, %105 : vector<1x128xf32>
    %c16 = arith.constant 16 : index
    %107 = memref.load %arg1[%c16] : memref<20xf32, #tpu.memory_space<smem>>
    %108 = vector.broadcast %107 : f32 to vector<1x128xf32>
    %109 = arith.mulf %108, %1 : vector<1x128xf32>
    %c17 = arith.constant 17 : index
    %110 = memref.load %arg1[%c17] : memref<20xf32, #tpu.memory_space<smem>>
    %111 = vector.broadcast %110 : f32 to vector<1x128xf32>
    %112 = arith.mulf %111, %3 : vector<1x128xf32>
    %113 = arith.addf %109, %112 : vector<1x128xf32>
    %cst_21 = arith.constant 0.000000e+00 : f32
    %114 = vector.broadcast %cst_21 : f32 to vector<1x128xf32>
    %115 = arith.maximumf %113, %114 : vector<1x128xf32>
    %c8_22 = arith.constant 8 : index
    %116 = memref.load %arg2[%c8_22] : memref<10xf32, #tpu.memory_space<smem>>
    %117 = vector.broadcast %116 : f32 to vector<1x128xf32>
    %118 = arith.mulf %117, %115 : vector<1x128xf32>
    %119 = arith.addf %106, %118 : vector<1x128xf32>
    %c18 = arith.constant 18 : index
    %120 = memref.load %arg1[%c18] : memref<20xf32, #tpu.memory_space<smem>>
    %121 = vector.broadcast %120 : f32 to vector<1x128xf32>
    %122 = arith.mulf %121, %1 : vector<1x128xf32>
    %c19 = arith.constant 19 : index
    %123 = memref.load %arg1[%c19] : memref<20xf32, #tpu.memory_space<smem>>
    %124 = vector.broadcast %123 : f32 to vector<1x128xf32>
    %125 = arith.mulf %124, %3 : vector<1x128xf32>
    %126 = arith.addf %122, %125 : vector<1x128xf32>
    %cst_23 = arith.constant 0.000000e+00 : f32
    %127 = vector.broadcast %cst_23 : f32 to vector<1x128xf32>
    %128 = arith.maximumf %126, %127 : vector<1x128xf32>
    %c9_24 = arith.constant 9 : index
    %129 = memref.load %arg2[%c9_24] : memref<10xf32, #tpu.memory_space<smem>>
    %130 = vector.broadcast %129 : f32 to vector<1x128xf32>
    %131 = arith.mulf %130, %128 : vector<1x128xf32>
    %132 = arith.addf %119, %131 : vector<1x128xf32>
    %c0_25 = arith.constant 0 : index
    %c0_26 = arith.constant 0 : index
    %133 = vector.load %arg4[%c0_25, %c0_26] : memref<1x128xf32, #tpu.memory_space<vmem>>, vector<1x128xf32>
    tpu.vector_store %arg4[%c0_25, %c0_26], %132 {strides = array<i32>} : memref<1x128xf32, #tpu.memory_space<vmem>>, vector<1x128xf32>,
    return
  }
  func.func @transform_0(%arg0: i32) -> i32 {
    %c0_i32 = arith.constant 0 : i32
    %c0_i32_0 = arith.constant 0 : i32
    return %c0_i32 : i32
  }
  func.func @transform_1(%arg0: i32) -> i32 {
    %c0_i32 = arith.constant 0 : i32
    %c0_i32_0 = arith.constant 0 : i32
    return %c0_i32 : i32
  }
  func.func @transform_2(%arg0: i32) -> (i32, i32, i32) {
    %c0_i32 = arith.constant 0 : i32
    %c0_i32_0 = arith.constant 0 : i32
    %c0_i32_1 = arith.constant 0 : i32
    return %c0_i32, %arg0, %c0_i32_0 : i32, i32, i32
  }
  func.func @transform_3(%arg0: i32) -> (i32, i32) {
    %c0_i32 = arith.constant 0 : i32
    %c0_i32_0 = arith.constant 0 : i32
    return %arg0, %c0_i32 : i32, i32
  }
}

</mosaic_0001>

<llo_original>
// kernel: net1_forward.1
$region0: #{net1_forward.1}
  #allocation0 [shape = 'u32[]', space=smem, size = 0x4, offset = 0x4, fixed_abs, tag = 'smem constant byte address 0x4 - core index']
  #allocation1 [shape = 'u32[144,128]{1,0:T(1,128)}', space=vmem, size = 0x12000, scoped, tag = 'internal scratch']
  %s0 = inlined_call_operand.vmem [shape: f32[20], index: 0, kind: input, shape index: {}]
  %s1 = inlined_call_operand.vmem [shape: f32[10], index: 1, kind: input, shape index: {}]
  %s2 = inlined_call_operand.vmem [shape: f32[2,1,128], index: 2, kind: input, shape index: {}]
  %s3 = inlined_call_operand.vmem [shape: f32[1,128], index: 3, kind: output, shape index: {}]
  %s4 = sld [smem:[#allocation0]]
  $region30: #{net1_forward.1} parent=0
    _
  %s6 = ssub.s32 1, %s4
  %s7 = scalar_select 0, %s6, %s4
  $region1: #{net1_forward.1} parent=0
    #allocation2 [shape = 'u8[512]{0}', space=smem, size = 0x200, scoped, tag = 'input window, operand 0, single buffered']
    #allocation3 [shape = 's32[1]{0}', space=sflag, size = 0x4, scoped, tag = 'scoped memory for net1_forward.1']
    #allocation4 [shape = 'u8[512]{0}', space=smem, size = 0x200, scoped, tag = 'input window, operand 1, single buffered']
    #allocation5 [shape = 's32[1]{0}', space=sflag, size = 0x4, scoped, tag = 'scoped memory for net1_forward.1']
    %8 = vsyncpa [#allocation3], 0
    %9 = vsyncpa [#allocation5], 0
    // Predicated region
    $region2: #{net1_forward.1} parent=1 // pred_check
      _
    $region3: #{net1_forward.1} parent=1 // pred_check_branch
      %11 = sbr.rel (0) target = $region5
    $region4: #{net1_forward.1} parent=1 // pred_region
      %s13 = ssub.s32 16, 16
      %14 = vsyncadd [#allocation3], %s13
      %s16 = sshll.u32 %s0, 4
      %s17 = int_to_ptr.vmem [resolvable:$true] %s16
      %19 = dma.vmem_to_smem %s17, 16, [#allocation2], [#allocation3]
    $region5: #{net1_forward.1} parent=1 // pred_fallthru
      _
    // Predicated region
    $region6: #{net1_forward.1} parent=1 // pred_check
      _
    $region7: #{net1_forward.1} parent=1 // pred_check_branch
      %21 = sbr.rel (0) target = $region9
    $region8: #{net1_forward.1} parent=1 // pred_region
      %s23 = ssub.s32 16, 16
      %24 = vsyncadd [#allocation5], %s23
      %s26 = sshll.u32 %s1, 4
      %s27 = int_to_ptr.vmem [resolvable:$true] %s26
      %29 = dma.vmem_to_smem %s27, 16, [#allocation4], [#allocation5]
    $region9: #{net1_forward.1} parent=1 // pred_fallthru
      _
    // Predicated region
    $region10: #{net1_forward.1} parent=1 // pred_check
      _
    $region11: #{net1_forward.1} parent=1 // pred_check_branch
      %31 = sbr.rel (0) target = $region13
    $region12: #{net1_forward.1} parent=1 // pred_region
      _
    $region13: #{net1_forward.1} parent=1 // pred_fallthru
      _
    // Predicated region
    $region14: #{net1_forward.1} parent=1 // pred_check
      _
    $region15: #{net1_forward.1} parent=1 // pred_check_branch
      %33 = sbr.rel (0) target = $region17
    $region16: #{net1_forward.1} parent=1 // pred_region
      %34 = dma.done [#allocation3], 16
    $region17: #{net1_forward.1} parent=1 // pred_fallthru
      _
    // Predicated region
    $region18: #{net1_forward.1} parent=1 // pred_check
      _
    $region19: #{net1_forward.1} parent=1 // pred_check_branch
      %36 = sbr.rel (0) target = $region21
    $region20: #{net1_forward.1} parent=1 // pred_region
      %37 = dma.done [#allocation5], 16
    $region21: #{net1_forward.1} parent=1 // pred_fallthru
      _
    %38 = sfence
    %v39 = vld [vmem:[%s2] sm:$0x1]
    %s40 = scalar_lea.vmem %s2, 1
    %v41 = vld [vmem:[%s40] sm:$0x1]
    %s42 = sld [smem:[#allocation2]]
    %v43 = vstv %s42
    %v44 = vmul.f32 %v43, %v39
    %s45 = sld [smem:[#allocation2 + $0x1]]
    %v46 = vstv %s45
    %v47 = vmul.f32 %v46, %v41
    %v48 = vadd.f32 %v44, %v47
    %v49 = vmax.f32 %v48, 0.0
    %s50 = sld [smem:[#allocation4]]
    %v51 = vstv %s50
    %v52 = vmul.f32 %v51, %v49
    %s53 = sld [smem:[#allocation2 + $0x2]]
    %v54 = vstv %s53
    %v55 = vmul.f32 %v54, %v39
    %s56 = sld [smem:[#allocation2 + $0x3]]
    %v57 = vstv %s56
    %v58 = vmul.f32 %v57, %v41
    %v59 = vadd.f32 %v55, %v58
    %v60 = vmax.f32 %v59, 0.0
    %s61 = sld [smem:[#allocation4 + $0x1]]
    %v62 = vstv %s61
    %v63 = vmul.f32 %v62, %v60
    %v64 = vadd.f32 %v52, %v63
    %s65 = sld [smem:[#allocation2 + $0x4]]
    %v66 = vstv %s65
    %v67 = vmul.f32 %v66, %v39
    %s68 = sld [smem:[#allocation2 + $0x5]]
    %v69 = vstv %s68
    %v70 = vmul.f32 %v69, %v41
    %v71 = vadd.f32 %v67, %v70
    %v72 = vmax.f32 %v71, 0.0
    %s73 = sld [smem:[#allocation4 + $0x2]]
    %v74 = vstv %s73
    %v75 = vmul.f32 %v74, %v72
    %v76 = vadd.f32 %v64, %v75
    %s77 = sld [smem:[#allocation2 + $0x6]]
    %v78 = vstv %s77
    %v79 = vmul.f32 %v78, %v39
    %s80 = sld [smem:[#allocation2 + $0x7]]
    %v81 = vstv %s80
    %v82 = vmul.f32 %v81, %v41
    %v83 = vadd.f32 %v79, %v82
    %v84 = vmax.f32 %v83, 0.0
    %s85 = sld [smem:[#allocation4 + $0x3]]
    %v86 = vstv %s85
    %v87 = vmul.f32 %v86, %v84
    %v88 = vadd.f32 %v76, %v87
    %s89 = sld [smem:[#allocation2 + $0x8]]
    %v90 = vstv %s89
    %v91 = vmul.f32 %v90, %v39
    %s92 = sld [smem:[#allocation2 + $0x9]]
    %v93 = vstv %s92
    %v94 = vmul.f32 %v93, %v41
    %v95 = vadd.f32 %v91, %v94
    %v96 = vmax.f32 %v95, 0.0
    %s97 = sld [smem:[#allocation4 + $0x4]]
    %v98 = vstv %s97
    %v99 = vmul.f32 %v98, %v96
    %v100 = vadd.f32 %v88, %v99
    %s101 = sld [smem:[#allocation2 + $0xa]]
    %v102 = vstv %s101
    %v103 = vmul.f32 %v102, %v39
    %s104 = sld [smem:[#allocation2 + $0xb]]
    %v105 = vstv %s104
    %v106 = vmul.f32 %v105, %v41
    %v107 = vadd.f32 %v103, %v106
    %v108 = vmax.f32 %v107, 0.0
    %s109 = sld [smem:[#allocation4 + $0x5]]
    %v110 = vstv %s109
    %v111 = vmul.f32 %v110, %v108
    %v112 = vadd.f32 %v100, %v111
    %s113 = sld [smem:[#allocation2 + $0xc]]
    %v114 = vstv %s113
    %v115 = vmul.f32 %v114, %v39
    %s116 = sld [smem:[#allocation2 + $0xd]]
    %v117 = vstv %s116
    %v118 = vmul.f32 %v117, %v41
    %v119 = vadd.f32 %v115, %v118
    %v120 = vmax.f32 %v119, 0.0
    %s121 = sld [smem:[#allocation4 + $0x6]]
    %v122 = vstv %s121
    %v123 = vmul.f32 %v122, %v120
    %v124 = vadd.f32 %v112, %v123
    %s125 = sld [smem:[#allocation2 + $0xe]]
    %v126 = vstv %s125
    %v127 = vmul.f32 %v126, %v39
    %s128 = sld [smem:[#allocation2 + $0xf]]
    %v129 = vstv %s128
    %v130 = vmul.f32 %v129, %v41
    %v131 = vadd.f32 %v127, %v130
    %v132 = vmax.f32 %v131, 0.0
    %s133 = sld [smem:[#allocation4 + $0x7]]
    %v134 = vstv %s133
    %v135 = vmul.f32 %v134, %v132
    %v136 = vadd.f32 %v124, %v135
    %s137 = sld [smem:[#allocation2 + $0x10]]
    %v138 = vstv %s137
    %v139 = vmul.f32 %v138, %v39
    %s140 = sld [smem:[#allocation2 + $0x11]]
    %v141 = vstv %s140
    %v142 = vmul.f32 %v141, %v41
    %v143 = vadd.f32 %v139, %v142
    %v144 = vmax.f32 %v143, 0.0
    %s145 = sld [smem:[#allocation4 + $0x8]]
    %v146 = vstv %s145
    %v147 = vmul.f32 %v146, %v144
    %v148 = vadd.f32 %v136, %v147
    %s149 = sld [smem:[#allocation2 + $0x12]]
    %v150 = vstv %s149
    %v151 = vmul.f32 %v150, %v39
    %s152 = sld [smem:[#allocation2 + $0x13]]
    %v153 = vstv %s152
    %v154 = vmul.f32 %v153, %v41
    %v155 = vadd.f32 %v151, %v154
    %v156 = vmax.f32 %v155, 0.0
    %s157 = sld [smem:[#allocation4 + $0x9]]
    %v158 = vstv %s157
    %v159 = vmul.f32 %v158, %v156
    %v160 = vadd.f32 %v148, %v159
    %161 = vst [vmem:[%s3] sm:$0x1] %v160
    // Predicated region
    $region22: #{net1_forward.1} parent=1 // pred_check
      _
    $region23: #{net1_forward.1} parent=1 // pred_check_branch
      %163 = sbr.rel (0) target = $region25
    $region24: #{net1_forward.1} parent=1 // pred_region
      _
    $region25: #{net1_forward.1} parent=1 // pred_fallthru
      _
    // Predicated region
    $region26: #{net1_forward.1} parent=1 // pred_check
      _
    $region27: #{net1_forward.1} parent=1 // pred_check_branch
      %165 = sbr.rel (0) target = $region29
    $region28: #{net1_forward.1} parent=1 // pred_region
      _
    $region29: #{net1_forward.1} parent=1 // pred_fallthru
      _
    %166 = vsyncpa [#allocation3], 1
    %167 = vsyncpa [#allocation5], 1

</llo_original>
